<compile_context>
chip_gen: v7x
topology: tpu7x:2x2x1
jax: 0.10.0
libtpu: 0.0.40
codegen_flags: <defaults>
</compile_context>

<pallas_src>
import jax
import jax.numpy as jnp
from jax.experimental import pallas as pl
from jax.experimental.pallas import tpu as pltpu


def _round_up(x, m):
    return (x + m - 1) // m * m


def mlp_kernel(x_ref,
               w1_ref, b1_ref,
               w2_ref, b2_ref,
               w3_ref, b3_ref,
               w4_ref, b4_ref,
               w5_ref, b5_ref,
               o_ref):
    """One batch tile of the fused 5-layer MLP forward.

    Matmuls hit the MXU with bf16 operands / f32 accumulation; sigmoid is a
    single EUP tanh with mul/add on the VPU; softmax stays f32 and is computed
    and stored at the real (narrow) output width.
    """
    def dense(h, w_ref, b_ref):
        # bf16 MXU operands, f32 accumulate; bias add in f32.
        return jnp.dot(h.astype(jnp.bfloat16), w_ref[...],
                       preferred_element_type=jnp.float32) + b_ref[...]

    def sigmoid(z):
        # sigmoid(x) = 0.5*tanh(0.5*x) + 0.5 : one EUP tanh per element
        # (instead of exp + full divide); mul/add ride in idle VALU slots.
        # Kept in f32 (v5e has no bf16 VPU/EUP).
        return 0.5 * jnp.tanh(0.5 * z) + 0.5

    x = x_ref[...].astype(jnp.bfloat16)        # single cast feeding layer-1 MXU
    h = sigmoid(dense(x, w1_ref, b1_ref))
    h = sigmoid(dense(h, w2_ref, b2_ref))
    h = sigmoid(dense(h, w3_ref, b3_ref))
    h = sigmoid(dense(h, w4_ref, b4_ref))
    logits = dense(h, w5_ref, b5_ref)          # (TB, out_dim), f32

    # softmax over the (narrow) last dim; exact reciprocal on the (TB, 1)
    # denominator is negligible and keeps row sums == 1.
    m = jnp.max(logits, axis=-1, keepdims=True)
    e = jnp.exp(logits - m)
    denom = jnp.sum(e, axis=-1, keepdims=True)
    o_ref[...] = (e * (1.0 / denom)).astype(o_ref.dtype)


def neural_net_forward(x, params, *, tb_max=2048):
    """params = [(W1,b1), ..., (W5,b5)] with Wi:[in,out], bi:[1,out] (float32)."""
    B, in_dim = x.shape
    hidden = params[0][0].shape[1]
    out_dim = params[-1][0].shape[1]

    # --- one-time layout prep -------------------------------------------------
    # bf16 weights: full-rate MXU and half the HBM bytes; f32 biases keep the
    # elementwise path native f32 on all chips (incl. v5e).
    flat = []
    for w, b in params:
        flat += [w.astype(jnp.bfloat16), b.astype(jnp.float32)]

    # --- batch tiling -----------------------------------------------------------
    # Balanced tiles (padding waste < 1 tile).  When the batch is big enough,
    # force >= 2 (and an even number of) grid steps so
    # dimension_semantics=("parallel",) actually shards across both v7x
    # TensorCores.  tb up to ~2048 rows amortizes the ~0.35us/step pipeline
    # overhead; per-step VMEM footprint is well under 1 MiB double-buffered.
    n_tiles = pl.cdiv(B, tb_max)
    if n_tiles < 2 and B > 8:
        n_tiles = 2
    if n_tiles > 1 and n_tiles % 2:
        n_tiles += 1
    tb = _round_up(pl.cdiv(B, n_tiles), 8)
    b_pad = n_tiles * tb
    if b_pad != B:
        x = jnp.pad(x, ((0, b_pad - B), (0, 0)))
    grid = (n_tiles,)

    x_spec = pl.BlockSpec((tb, in_dim), lambda i: (i, 0))
    # Weights/biases: full-array blocks with constant index maps -> DMA'd once
    # and kept resident in VMEM across all batch tiles.
    param_specs = [pl.BlockSpec(p.shape, lambda i: (0, 0)) for p in flat]
    # Narrow (real out_dim) output block: no padded writeback, no wrapper slice.
    out_spec = pl.BlockSpec((tb, out_dim), lambda i: (i, 0))

    flops = 2 * b_pad * (in_dim * hidden + 3 * hidden * hidden
                         + hidden * out_dim)
    transcendentals = b_pad * (4 * hidden + out_dim)   # tanh sigmoids + softmax exp
    bytes_accessed = (x.size * x.dtype.itemsize
                      + sum(int(p.size) * p.dtype.itemsize for p in flat)
                      + b_pad * out_dim * 4)

    out = pl.pallas_call(
        mlp_kernel,
        out_shape=jax.ShapeDtypeStruct((b_pad, out_dim), jnp.float32),
        grid=grid,
        in_specs=[x_spec] + param_specs,
        out_specs=out_spec,
        compiler_params=pltpu.CompilerParams(
            # Batch tiles are independent -> megacore-shard on v7x;
            # no-op on v5e/v6e (single TC).
            dimension_semantics=("parallel",),
            vmem_limit_bytes=32 << 20,
        ),
        cost_estimate=pl.CostEstimate(
            flops=flops,
            transcendentals=transcendentals,
            bytes_accessed=bytes_accessed,
        ),
    )(x, *flat)
    return out[:B] if b_pad != B else out


def init_params(key, input_dim, output_dim, hidden_dim=32):
    """Deterministic init mimicking nn.Linear default (uniform +-1/sqrt(fan_in))."""
    dims = [input_dim, hidden_dim, hidden_dim, hidden_dim, hidden_dim, output_dim]
    params = []
    for i in range(5):
        key, kw, kb = jax.random.split(key, 3)
        fan_in = dims[i]
        bound = 1.0 / (fan_in ** 0.5)
        w = jax.random.uniform(kw, (dims[i], dims[i + 1]), jnp.float32,
                               minval=-bound, maxval=bound)
        b = jax.random.uniform(kb, (1, dims[i + 1]), jnp.float32,
                               minval=-bound, maxval=bound)
        params.append((w, b))
    return params


def reference_forward(x, params):
    """Pure-JAX reference matching the PyTorch forward (f32 throughout)."""
    h = x
    for w, b in params[:-1]:
        h = jax.nn.sigmoid(h @ w + b)
    w, b = params[-1]
    return jax.nn.softmax(h @ w + b, axis=-1)


if __name__ == "__main__":
    key = jax.random.PRNGKey(0)
    batch = 4          # module's batchsize
    input_dim = 16
    hidden_dim = 32
    output_dim = 8

    key, kx = jax.random.split(key)
    x = jax.random.normal(kx, (batch, input_dim), jnp.float32)
    params = init_params(key, input_dim, output_dim, hidden_dim)

    out = neural_net_forward(x, params)
    out = jax.block_until_ready(out)

    # sanity: shape, softmax rows sum to ~1 (exact reciprocal), agreement with
    # the f32 reference (bf16 matmul operands -> ~1e-2 abs tol).
    assert out.shape == (batch, output_dim)
    assert jnp.allclose(jnp.sum(out, axis=-1), 1.0, atol=1e-4)
    ref = reference_forward(x, params)
    assert jnp.allclose(out, ref, atol=2e-2), float(jnp.max(jnp.abs(out - ref)))

    # also exercise the multi-tile (grid >= 2, padded batch) path
    key, kx2 = jax.random.split(key)
    x2 = jax.random.normal(kx2, (100, input_dim), jnp.float32)
    out2 = jax.block_until_ready(neural_net_forward(x2, params))
    assert out2.shape == (100, output_dim)
    ref2 = reference_forward(x2, params)
    assert jnp.allclose(out2, ref2, atol=2e-2), float(jnp.max(jnp.abs(out2 - ref2)))

    print("KERNEL_OK")
</pallas_src>

<mosaic_0001>
module attributes {stable_mosaic.version = 11 : i64} {
  func.func @mlp_kernel(%arg0: i32, %arg1: memref<8x16xf32, #tpu.memory_space<vmem>>, %arg2: memref<16x32xbf16, #tpu.memory_space<vmem>>, %arg3: memref<1x32xf32, #tpu.memory_space<vmem>>, %arg4: memref<32x32xbf16, #tpu.memory_space<vmem>>, %arg5: memref<1x32xf32, #tpu.memory_space<vmem>>, %arg6: memref<32x32xbf16, #tpu.memory_space<vmem>>, %arg7: memref<1x32xf32, #tpu.memory_space<vmem>>, %arg8: memref<32x32xbf16, #tpu.memory_space<vmem>>, %arg9: memref<1x32xf32, #tpu.memory_space<vmem>>, %arg10: memref<32x8xbf16, #tpu.memory_space<vmem>>, %arg11: memref<1x8xf32, #tpu.memory_space<vmem>>, %arg12: memref<8x8xf32, #tpu.memory_space<vmem>>) attributes {dimension_semantics = [#tpu.dimension_semantics<parallel>], iteration_bounds = array<i64: 1>, scalar_prefetch = 0 : i64, scratch_operands = 0 : i64, tpu.core_type = #tpu.core_type<tc>, window_params = [{transform_indices = @transform_0, window_bounds = array<i64: 8, 16>}, {pipeline_mode = #tpu.pipeline_mode<synchronous>, transform_indices = @transform_1, window_bounds = array<i64: 16, 32>}, {pipeline_mode = #tpu.pipeline_mode<synchronous>, transform_indices = @transform_2, window_bounds = array<i64: 1, 32>}, {pipeline_mode = #tpu.pipeline_mode<synchronous>, transform_indices = @transform_3, window_bounds = array<i64: 32, 32>}, {pipeline_mode = #tpu.pipeline_mode<synchronous>, transform_indices = @transform_4, window_bounds = array<i64: 1, 32>}, {pipeline_mode = #tpu.pipeline_mode<synchronous>, transform_indices = @transform_5, window_bounds = array<i64: 32, 32>}, {pipeline_mode = #tpu.pipeline_mode<synchronous>, transform_indices = @transform_6, window_bounds = array<i64: 1, 32>}, {pipeline_mode = #tpu.pipeline_mode<synchronous>, transform_indices = @transform_7, window_bounds = array<i64: 32, 32>}, {pipeline_mode = #tpu.pipeline_mode<synchronous>, transform_indices = @transform_8, window_bounds = array<i64: 1, 32>}, {pipeline_mode = #tpu.pipeline_mode<synchronous>, transform_indices = @transform_9, window_bounds = array<i64: 32, 8>}, {pipeline_mode = #tpu.pipeline_mode<synchronous>, transform_indices = @transform_10, window_bounds = array<i64: 1, 8>}, {transform_indices = @transform_11, window_bounds = array<i64: 8, 8>}]} {
    %c0 = arith.constant 0 : index
    %c0_0 = arith.constant 0 : index
    %0 = vector.load %arg1[%c0, %c0_0] : memref<8x16xf32, #tpu.memory_space<vmem>>, vector<8x16xf32>
    %1 = arith.truncf %0 : vector<8x16xf32> to vector<8x16xbf16>
    %c0_1 = arith.constant 0 : index
    %c0_2 = arith.constant 0 : index
    %2 = vector.load %arg2[%c0_1, %c0_2] : memref<16x32xbf16, #tpu.memory_space<vmem>>, vector<16x32xbf16>
    %cst = arith.constant dense<0.000000e+00> : vector<8x32xf32>
    %3 = tpu.matmul %1, %2, %cst {dimension_numbers = #tpu.dot_dimension_numbers<[1], [0], [0], [1], [0, 0, 1, 1], [], []>} : vector<8x16xbf16>, vector<16x32xbf16>, vector<8x32xf32> -> vector<8x32xf32>
    %c0_3 = arith.constant 0 : index
    %c0_4 = arith.constant 0 : index
    %4 = vector.load %arg3[%c0_3, %c0_4] : memref<1x32xf32, #tpu.memory_space<vmem>>, vector<1x32xf32>
    %5 = vector.broadcast %4 : vector<1x32xf32> to vector<8x32xf32>
    %6 = arith.addf %3, %5 : vector<8x32xf32>
    %cst_5 = arith.constant 5.000000e-01 : f32
    %7 = vector.broadcast %cst_5 : f32 to vector<8x32xf32>
    %8 = arith.mulf %7, %6 : vector<8x32xf32>
    %9 = math.tanh %8 : vector<8x32xf32>
    %cst_6 = arith.constant 5.000000e-01 : f32
    %10 = vector.broadcast %cst_6 : f32 to vector<8x32xf32>
    %11 = arith.mulf %10, %9 : vector<8x32xf32>
    %cst_7 = arith.constant 5.000000e-01 : f32
    %12 = vector.broadcast %cst_7 : f32 to vector<8x32xf32>
    %13 = arith.addf %11, %12 : vector<8x32xf32>
    %14 = arith.truncf %13 : vector<8x32xf32> to vector<8x32xbf16>
    %c0_8 = arith.constant 0 : index
    %c0_9 = arith.constant 0 : index
    %15 = vector.load %arg4[%c0_8, %c0_9] : memref<32x32xbf16, #tpu.memory_space<vmem>>, vector<32x32xbf16>
    %cst_10 = arith.constant dense<0.000000e+00> : vector<8x32xf32>
    %16 = tpu.matmul %14, %15, %cst_10 {dimension_numbers = #tpu.dot_dimension_numbers<[1], [0], [0], [1], [0, 0, 1, 1], [], []>} : vector<8x32xbf16>, vector<32x32xbf16>, vector<8x32xf32> -> vector<8x32xf32>
    %c0_11 = arith.constant 0 : index
    %c0_12 = arith.constant 0 : index
    %17 = vector.load %arg5[%c0_11, %c0_12] : memref<1x32xf32, #tpu.memory_space<vmem>>, vector<1x32xf32>
    %18 = vector.broadcast %17 : vector<1x32xf32> to vector<8x32xf32>
    %19 = arith.addf %16, %18 : vector<8x32xf32>
    %cst_13 = arith.constant 5.000000e-01 : f32
    %20 = vector.broadcast %cst_13 : f32 to vector<8x32xf32>
    %21 = arith.mulf %20, %19 : vector<8x32xf32>
    %22 = math.tanh %21 : vector<8x32xf32>
    %cst_14 = arith.constant 5.000000e-01 : f32
    %23 = vector.broadcast %cst_14 : f32 to vector<8x32xf32>
    %24 = arith.mulf %23, %22 : vector<8x32xf32>
    %cst_15 = arith.constant 5.000000e-01 : f32
    %25 = vector.broadcast %cst_15 : f32 to vector<8x32xf32>
    %26 = arith.addf %24, %25 : vector<8x32xf32>
    %27 = arith.truncf %26 : vector<8x32xf32> to vector<8x32xbf16>
    %c0_16 = arith.constant 0 : index
    %c0_17 = arith.constant 0 : index
    %28 = vector.load %arg6[%c0_16, %c0_17] : memref<32x32xbf16, #tpu.memory_space<vmem>>, vector<32x32xbf16>
    %cst_18 = arith.constant dense<0.000000e+00> : vector<8x32xf32>
    %29 = tpu.matmul %27, %28, %cst_18 {dimension_numbers = #tpu.dot_dimension_numbers<[1], [0], [0], [1], [0, 0, 1, 1], [], []>} : vector<8x32xbf16>, vector<32x32xbf16>, vector<8x32xf32> -> vector<8x32xf32>
    %c0_19 = arith.constant 0 : index
    %c0_20 = arith.constant 0 : index
    %30 = vector.load %arg7[%c0_19, %c0_20] : memref<1x32xf32, #tpu.memory_space<vmem>>, vector<1x32xf32>
    %31 = vector.broadcast %30 : vector<1x32xf32> to vector<8x32xf32>
    %32 = arith.addf %29, %31 : vector<8x32xf32>
    %cst_21 = arith.constant 5.000000e-01 : f32
    %33 = vector.broadcast %cst_21 : f32 to vector<8x32xf32>
    %34 = arith.mulf %33, %32 : vector<8x32xf32>
    %35 = math.tanh %34 : vector<8x32xf32>
    %cst_22 = arith.constant 5.000000e-01 : f32
    %36 = vector.broadcast %cst_22 : f32 to vector<8x32xf32>
    %37 = arith.mulf %36, %35 : vector<8x32xf32>
    %cst_23 = arith.constant 5.000000e-01 : f32
    %38 = vector.broadcast %cst_23 : f32 to vector<8x32xf32>
    %39 = arith.addf %37, %38 : vector<8x32xf32>
    %40 = arith.truncf %39 : vector<8x32xf32> to vector<8x32xbf16>
    %c0_24 = arith.constant 0 : index
    %c0_25 = arith.constant 0 : index
    %41 = vector.load %arg8[%c0_24, %c0_25] : memref<32x32xbf16, #tpu.memory_space<vmem>>, vector<32x32xbf16>
    %cst_26 = arith.constant dense<0.000000e+00> : vector<8x32xf32>
    %42 = tpu.matmul %40, %41, %cst_26 {dimension_numbers = #tpu.dot_dimension_numbers<[1], [0], [0], [1], [0, 0, 1, 1], [], []>} : vector<8x32xbf16>, vector<32x32xbf16>, vector<8x32xf32> -> vector<8x32xf32>
    %c0_27 = arith.constant 0 : index
    %c0_28 = arith.constant 0 : index
    %43 = vector.load %arg9[%c0_27, %c0_28] : memref<1x32xf32, #tpu.memory_space<vmem>>, vector<1x32xf32>
    %44 = vector.broadcast %43 : vector<1x32xf32> to vector<8x32xf32>
    %45 = arith.addf %42, %44 : vector<8x32xf32>
    %cst_29 = arith.constant 5.000000e-01 : f32
    %46 = vector.broadcast %cst_29 : f32 to vector<8x32xf32>
    %47 = arith.mulf %46, %45 : vector<8x32xf32>
    %48 = math.tanh %47 : vector<8x32xf32>
    %cst_30 = arith.constant 5.000000e-01 : f32
    %49 = vector.broadcast %cst_30 : f32 to vector<8x32xf32>
    %50 = arith.mulf %49, %48 : vector<8x32xf32>
    %cst_31 = arith.constant 5.000000e-01 : f32
    %51 = vector.broadcast %cst_31 : f32 to vector<8x32xf32>
    %52 = arith.addf %50, %51 : vector<8x32xf32>
    %53 = arith.truncf %52 : vector<8x32xf32> to vector<8x32xbf16>
    %c0_32 = arith.constant 0 : index
    %c0_33 = arith.constant 0 : index
    %54 = vector.load %arg10[%c0_32, %c0_33] : memref<32x8xbf16, #tpu.memory_space<vmem>>, vector<32x8xbf16>
    %cst_34 = arith.constant dense<0.000000e+00> : vector<8x8xf32>
    %55 = tpu.matmul %53, %54, %cst_34 {dimension_numbers = #tpu.dot_dimension_numbers<[1], [0], [0], [1], [0, 0, 1, 1], [], []>} : vector<8x32xbf16>, vector<32x8xbf16>, vector<8x8xf32> -> vector<8x8xf32>
    %c0_35 = arith.constant 0 : index
    %c0_36 = arith.constant 0 : index
    %56 = vector.load %arg11[%c0_35, %c0_36] : memref<1x8xf32, #tpu.memory_space<vmem>>, vector<1x8xf32>
    %57 = vector.broadcast %56 : vector<1x8xf32> to vector<8x8xf32>
    %58 = arith.addf %55, %57 : vector<8x8xf32>
    %cst_37 = arith.constant dense<0xFF800000> : vector<8xf32>
    %59 = vector.multi_reduction <maximumf>, %58, %cst_37 [1] : vector<8x8xf32> to vector<8xf32>
    %60 = vector.shape_cast %59 : vector<8xf32> to vector<8x1xf32>
    %61 = vector.broadcast %60 : vector<8x1xf32> to vector<8x8xf32>
    %62 = arith.subf %58, %61 : vector<8x8xf32>
    %63 = math.exp %62 : vector<8x8xf32>
    %cst_38 = arith.constant dense<0.000000e+00> : vector<8xf32>
    %64 = vector.multi_reduction <add>, %63, %cst_38 [1] : vector<8x8xf32> to vector<8xf32>
    %65 = vector.shape_cast %64 : vector<8xf32> to vector<8x1xf32>
    %cst_39 = arith.constant 1.000000e+00 : f32
    %66 = vector.broadcast %cst_39 : f32 to vector<8x1xf32>
    %67 = arith.divf %66, %65 : vector<8x1xf32>
    %68 = vector.broadcast %67 : vector<8x1xf32> to vector<8x8xf32>
    %69 = arith.mulf %63, %68 : vector<8x8xf32>
    %c0_40 = arith.constant 0 : index
    %c0_41 = arith.constant 0 : index
    %70 = vector.load %arg12[%c0_40, %c0_41] : memref<8x8xf32, #tpu.memory_space<vmem>>, vector<8x8xf32>
    tpu.vector_store %arg12[%c0_40, %c0_41], %69 {strides = array<i32>} : memref<8x8xf32, #tpu.memory_space<vmem>>, vector<8x8xf32>,
    return
  }
  func.func @transform_0(%arg0: i32) -> (i32, i32) {
    %c0_i32 = arith.constant 0 : i32
    %c0_i32_0 = arith.constant 0 : i32
    return %arg0, %c0_i32 : i32, i32
  }
  func.func @transform_1(%arg0: i32) -> (i32, i32) {
    %c0_i32 = arith.constant 0 : i32
    %c0_i32_0 = arith.constant 0 : i32
    %c0_i32_1 = arith.constant 0 : i32
    return %c0_i32, %c0_i32_0 : i32, i32
  }
  func.func @transform_2(%arg0: i32) -> (i32, i32) {
    %c0_i32 = arith.constant 0 : i32
    %c0_i32_0 = arith.constant 0 : i32
    %c0_i32_1 = arith.constant 0 : i32
    return %c0_i32, %c0_i32_0 : i32, i32
  }
  func.func @transform_3(%arg0: i32) -> (i32, i32) {
    %c0_i32 = arith.constant 0 : i32
    %c0_i32_0 = arith.constant 0 : i32
    %c0_i32_1 = arith.constant 0 : i32
    return %c0_i32, %c0_i32_0 : i32, i32
  }
  func.func @transform_4(%arg0: i32) -> (i32, i32) {
    %c0_i32 = arith.constant 0 : i32
    %c0_i32_0 = arith.constant 0 : i32
    %c0_i32_1 = arith.constant 0 : i32
    return %c0_i32, %c0_i32_0 : i32, i32
  }
  func.func @transform_5(%arg0: i32) -> (i32, i32) {
    %c0_i32 = arith.constant 0 : i32
    %c0_i32_0 = arith.constant 0 : i32
    %c0_i32_1 = arith.constant 0 : i32
    return %c0_i32, %c0_i32_0 : i32, i32
  }
  func.func @transform_6(%arg0: i32) -> (i32, i32) {
    %c0_i32 = arith.constant 0 : i32
    %c0_i32_0 = arith.constant 0 : i32
    %c0_i32_1 = arith.constant 0 : i32
    return %c0_i32, %c0_i32_0 : i32, i32
  }
  func.func @transform_7(%arg0: i32) -> (i32, i32) {
    %c0_i32 = arith.constant 0 : i32
    %c0_i32_0 = arith.constant 0 : i32
    %c0_i32_1 = arith.constant 0 : i32
    return %c0_i32, %c0_i32_0 : i32, i32
  }
  func.func @transform_8(%arg0: i32) -> (i32, i32) {
    %c0_i32 = arith.constant 0 : i32
    %c0_i32_0 = arith.constant 0 : i32
    %c0_i32_1 = arith.constant 0 : i32
    return %c0_i32, %c0_i32_0 : i32, i32
  }
  func.func @transform_9(%arg0: i32) -> (i32, i32) {
    %c0_i32 = arith.constant 0 : i32
    %c0_i32_0 = arith.constant 0 : i32
    %c0_i32_1 = arith.constant 0 : i32
    return %c0_i32, %c0_i32_0 : i32, i32
  }
  func.func @transform_10(%arg0: i32) -> (i32, i32) {
    %c0_i32 = arith.constant 0 : i32
    %c0_i32_0 = arith.constant 0 : i32
    %c0_i32_1 = arith.constant 0 : i32
    return %c0_i32, %c0_i32_0 : i32, i32
  }
  func.func @transform_11(%arg0: i32) -> (i32, i32) {
    %c0_i32 = arith.constant 0 : i32
    %c0_i32_0 = arith.constant 0 : i32
    return %arg0, %c0_i32 : i32, i32
  }
}

</mosaic_0001>

<llo_original>
// kernel: tpu_custom_call.1
$region0: #{tpu_custom_call.1}
  #allocation0 [shape = 'u32[]', space=smem, size = 0x4, offset = 0x4, fixed_abs, tag = 'smem constant byte address 0x4 - core index']
  #allocation1 [shape = 'u32[144,128]{1,0:T(1,128)}', space=vmem, size = 0x12000, scoped, tag = 'internal scratch']
  %s0 = inlined_call_operand.hbm [shape: f32[8,16], index: 0, kind: input, shape index: {}]
  %s1 = inlined_call_operand.hbm [shape: bf16[16,32], index: 1, kind: input, shape index: {}]
  %s2 = inlined_call_operand.vmem [shape: f32[1,32], index: 2, kind: input, shape index: {}]
  %s3 = inlined_call_operand.vmem [shape: bf16[32,32], index: 3, kind: input, shape index: {}]
  %s4 = inlined_call_operand.vmem [shape: f32[1,32], index: 4, kind: input, shape index: {}]
  %s5 = inlined_call_operand.vmem [shape: bf16[32,32], index: 5, kind: input, shape index: {}]
  %s6 = inlined_call_operand.vmem [shape: f32[1,32], index: 6, kind: input, shape index: {}]
  %s7 = inlined_call_operand.hbm [shape: bf16[32,32], index: 7, kind: input, shape index: {}]
  %s8 = inlined_call_operand.vmem [shape: f32[1,32], index: 8, kind: input, shape index: {}]
  %s9 = inlined_call_operand.vmem [shape: bf16[32,8], index: 9, kind: input, shape index: {}]
  %s10 = inlined_call_operand.vmem [shape: f32[1,8], index: 10, kind: input, shape index: {}]
  %s11 = inlined_call_operand.hbm [shape: f32[8,8], index: 11, kind: output, shape index: {}]
  %s12 = sld [smem:[#allocation0]]
  $region66: #{tpu_custom_call.1} parent=0
    _
  %s14 = ssub.s32 1, %s12
  %s15 = scalar_select 0, %s14, %s12
  $region1: #{tpu_custom_call.1} parent=0
    #allocation2 [shape = 'u8[4096]{0}', space=vmem, size = 0x1000, scoped, tag = 'input window, operand 0, single buffered']
    #allocation3 [shape = 's32[1]{0}', space=sflag, size = 0x4, scoped, tag = 'scoped memory for tpu_custom_call.1']
    #allocation4 [shape = 's32[1]{0}', space=sflag, size = 0x4, scoped, tag = 'scoped memory for tpu_custom_call.1']
    #allocation5 [shape = 'u8[4096]{0}', space=vmem, size = 0x1000, scoped, tag = 'input window, operand 1, single buffered']
    #allocation6 [shape = 's32[1]{0}', space=sflag, size = 0x4, scoped, tag = 'scoped memory for tpu_custom_call.1']
    #allocation7 [shape = 'u8[8192]{0}', space=vmem, size = 0x2000, scoped, tag = 'input window, operand 7, single buffered']
    #allocation8 [shape = 'u8[4096]{0}', space=vmem, size = 0x1000, scoped, tag = 'output window, operand 0, single buffered']
    %16 = vsyncpa [#allocation3], 0
    %17 = vsyncpa [#allocation6], 0
    %18 = vsyncpa [#allocation4], 0
    // Predicated region
    $region2: #{tpu_custom_call.1} parent=1 // pred_check
      _
    $region3: #{tpu_custom_call.1} parent=1 // pred_check_branch
      %20 = sbr.rel (0) target = $region5
    $region4: #{tpu_custom_call.1} parent=1 // pred_region
      %s22 = ssub.s32 128, 128
      %23 = vsyncadd [#allocation3], %s22
      %s25 = sshll.u32 [#allocation2], 4
      %s26 = int_to_ptr.vmem [resolvable:$true] %s25
      %28 = dma.hbm_to_vmem [thread:$0]  %s0, 128, %s26, [#allocation3]
    $region5: #{tpu_custom_call.1} parent=1 // pred_fallthru
      _
    // Predicated region
    $region6: #{tpu_custom_call.1} parent=1 // pred_check
      _
    $region7: #{tpu_custom_call.1} parent=1 // pred_check_branch
      %30 = sbr.rel (0) target = $region9
    $region8: #{tpu_custom_call.1} parent=1 // pred_region
      %s32 = ssub.s32 128, 128
      %33 = vsyncadd [#allocation6], %s32
      %s34 = sshll.u32 [#allocation5], 4
      %s35 = int_to_ptr.vmem [resolvable:$true] %s34
      %40 = dma.hbm_to_vmem [thread:$0]  %s1, 128, %s35, [#allocation6], 64, 64, 4
    $region9: #{tpu_custom_call.1} parent=1 // pred_fallthru
      _
    // Predicated region
    $region10: #{tpu_custom_call.1} parent=1 // pred_check
      _
    $region11: #{tpu_custom_call.1} parent=1 // pred_check_branch
      %42 = sbr.rel (0) target = $region13
    $region12: #{tpu_custom_call.1} parent=1 // pred_region
      _
    $region13: #{tpu_custom_call.1} parent=1 // pred_fallthru
      _
    // Predicated region
    $region14: #{tpu_custom_call.1} parent=1 // pred_check
      _
    $region15: #{tpu_custom_call.1} parent=1 // pred_check_branch
      %44 = sbr.rel (0) target = $region17
    $region16: #{tpu_custom_call.1} parent=1 // pred_region
      _
    $region17: #{tpu_custom_call.1} parent=1 // pred_fallthru
      _
    // Predicated region
    $region18: #{tpu_custom_call.1} parent=1 // pred_check
      _
    $region19: #{tpu_custom_call.1} parent=1 // pred_check_branch
      %46 = sbr.rel (0) target = $region21
    $region20: #{tpu_custom_call.1} parent=1 // pred_region
      _
    $region21: #{tpu_custom_call.1} parent=1 // pred_fallthru
      _
    // Predicated region
    $region22: #{tpu_custom_call.1} parent=1 // pred_check
      _
    $region23: #{tpu_custom_call.1} parent=1 // pred_check_branch
      %48 = sbr.rel (0) target = $region25
    $region24: #{tpu_custom_call.1} parent=1 // pred_region
      _
    $region25: #{tpu_custom_call.1} parent=1 // pred_fallthru
      _
    // Predicated region
    $region26: #{tpu_custom_call.1} parent=1 // pred_check
      _
    $region27: #{tpu_custom_call.1} parent=1 // pred_check_branch
      %50 = sbr.rel (0) target = $region29
    $region28: #{tpu_custom_call.1} parent=1 // pred_region
      _
    $region29: #{tpu_custom_call.1} parent=1 // pred_fallthru
      _
    // Predicated region
    $region30: #{tpu_custom_call.1} parent=1 // pred_check
      _
    $region31: #{tpu_custom_call.1} parent=1 // pred_check_branch
      %52 = sbr.rel (0) target = $region33
    $region32: #{tpu_custom_call.1} parent=1 // pred_region
      %s54 = ssub.s32 256, 256
      %55 = vsyncadd [#allocation6], %s54
      %s56 = sshll.u32 [#allocation7], 4
      %s57 = int_to_ptr.vmem [resolvable:$true] %s56
      %62 = dma.hbm_to_vmem [thread:$0]  %s7, 256, %s57, [#allocation6], 64, 64, 4
    $region33: #{tpu_custom_call.1} parent=1 // pred_fallthru
      _
    // Predicated region
    $region34: #{tpu_custom_call.1} parent=1 // pred_check
      _
    $region35: #{tpu_custom_call.1} parent=1 // pred_check_branch
      %64 = sbr.rel (0) target = $region37
    $region36: #{tpu_custom_call.1} parent=1 // pred_region
      _
    $region37: #{tpu_custom_call.1} parent=1 // pred_fallthru
      _
    // Predicated region
    $region38: #{tpu_custom_call.1} parent=1 // pred_check
      _
    $region39: #{tpu_custom_call.1} parent=1 // pred_check_branch
      %66 = sbr.rel (0) target = $region41
    $region40: #{tpu_custom_call.1} parent=1 // pred_region
      _
    $region41: #{tpu_custom_call.1} parent=1 // pred_fallthru
      _
    // Predicated region
    $region42: #{tpu_custom_call.1} parent=1 // pred_check
      _
    $region43: #{tpu_custom_call.1} parent=1 // pred_check_branch
      %68 = sbr.rel (0) target = $region45
    $region44: #{tpu_custom_call.1} parent=1 // pred_region
      _
    $region45: #{tpu_custom_call.1} parent=1 // pred_fallthru
      _
    // Predicated region
    $region46: #{tpu_custom_call.1} parent=1 // pred_check
      _
    $region47: #{tpu_custom_call.1} parent=1 // pred_check_branch
      %70 = sbr.rel (0) target = $region49
    $region48: #{tpu_custom_call.1} parent=1 // pred_region
      %71 = dma.done [#allocation3], 128
    $region49: #{tpu_custom_call.1} parent=1 // pred_fallthru
      _
    // Predicated region
    $region50: #{tpu_custom_call.1} parent=1 // pred_check
      _
    $region51: #{tpu_custom_call.1} parent=1 // pred_check_branch
      %73 = sbr.rel (0) target = $region53
    $region52: #{tpu_custom_call.1} parent=1 // pred_region
      %74 = dma.done [#allocation6], 128
    $region53: #{tpu_custom_call.1} parent=1 // pred_fallthru
      _
    // Predicated region
    $region54: #{tpu_custom_call.1} parent=1 // pred_check
      _
    $region55: #{tpu_custom_call.1} parent=1 // pred_check_branch
      %76 = sbr.rel (0) target = $region57
    $region56: #{tpu_custom_call.1} parent=1 // pred_region
      %77 = dma.done [#allocation6], 256
    $region57: #{tpu_custom_call.1} parent=1 // pred_fallthru
      _
    %v79 = vld [vmem:[#allocation2] sm:$0xff]
    %v80 = vpack.c.bf16 %v79, %v79
    %v81 = vld [vmem:[#allocation5] sm:$0xf]
    %v82 = vld [vmem:[#allocation5 + $0x4] sm:$0xf]
    %v83 = vld [vmem:[%s2] sm:$0x1]
    %v85 = vlaneseq
    %v86 = vshrl.u32 %v85, 7
    %v87 = vsub.s32 0, %v86
    %v88 = vrot.slane %v83, %v87
    %v92 = vunpack.c.l.b16 %v81
    %v93 = vunpack.c.l.b16 %v82
    %v94 = vpack.c.b16 %v93, %v92
    %vm96 = vcmask 130048
    %v98 = vsel %vm96, %v80, 0
    %100 = vmatprep.subr.bf16.mxu0 0
    %101 = vmatpush1.bf16.msra.mxu0 %v94
    %102 = vmatprep.subr.bf16.mxu0 0
    %103 = vmatpush1.bf16.msra.mxu0 0
    %104 = vmatprep.subr.bf16.mxu0 0
    %105 = vmatpush1.bf16.msra.mxu0 0
    %106 = vmatprep.subr.bf16.mxu0 0
    %107 = vmatpush1.bf16.msra.mxu0 0
    %108 = vmatprep.subr.bf16.mxu0 0
    %109 = vmatpush1.bf16.msra.mxu0 0
    %110 = vmatprep.subr.bf16.mxu0 0
    %111 = vmatpush1.bf16.msra.mxu0 0
    %112 = vmatprep.subr.bf16.mxu0 0
    %113 = vmatpush1.bf16.msra.mxu0 0
    %114 = vmatprep.subr.bf16.mxu0 0
    %115 = vmatpush1.bf16.msra.mxu0 0
    %116 = vmatprep.subr.bf16.mxu0 0
    %117 = vmatpush1.bf16.msra.mxu0 0
    %118 = vmatprep.subr.bf16.mxu0 0
    %119 = vmatpush1.bf16.msra.mxu0 0
    %120 = vmatprep.subr.bf16.mxu0 0
    %121 = vmatpush1.bf16.msra.mxu0 0
    %122 = vmatprep.subr.bf16.mxu0 0
    %123 = vmatpush1.bf16.msra.mxu0 0
    %124 = vmatprep.subr.bf16.mxu0 0
    %125 = vmatpush1.bf16.msra.mxu0 0
    %126 = vmatprep.subr.bf16.mxu0 0
    %127 = vmatpush1.bf16.msra.mxu0 0
    %128 = vmatprep.subr.bf16.mxu0 0
    %129 = vmatpush1.bf16.msra.mxu0 0
    %130 = vmatprep.subr.bf16.mxu0 0
    %131 = vmatpush1.bf16.msra.mxu0 0
    %132 = vmatprep.mubr.bf16.mxu0 0
    %133 = vmatmul.mubr.bf16.gmra.mrb[0].mxu0 %v98
    %v134 = vpop.f32.mrb[0].mxu0
    %v135 = vadd.f32 %v88, %v134
    %v136 = vpop.f32.mrb[0].mxu0
    %v137 = vpop.f32.mrb[0].mxu0
    %v138 = vpop.f32.mrb[0].mxu0
    %139 = vdwg.mxu0
    %v140 = vmul.f32 %v135, 0.5
    %v141 = vtanh.pop %v140
    %v142 = vmul.f32 %v141, 0.5
    %v143 = vadd.f32 %v142, 0.5
    %v144 = vpack.c.bf16 %v143, %v143
    %v145 = vld [vmem:[%s3] sm:$0xf]
    %v146 = vld [vmem:[%s3 + $0x4] sm:$0xf]
    %v147 = vld [vmem:[%s3 + $0x8] sm:$0xf]
    %v148 = vld [vmem:[%s3 + $0xc] sm:$0xf]
    %v149 = vld [vmem:[%s4] sm:$0x1]
    %v151 = vlaneseq
    %v152 = vshrl.u32 %v151, 7
    %v153 = vsub.s32 0, %v152
    %v154 = vrot.slane %v149, %v153
    %v160 = vunpack.c.l.b16 %v145
    %v161 = vunpack.c.l.b16 %v146
    %v162 = vunpack.c.l.b16 %v147
    %v163 = vunpack.c.l.b16 %v148
    %v164 = vpack.c.b16 %v161, %v160
    %v165 = vpack.c.b16 %v163, %v162
    %vm168 = vcmask 261120
    %v170 = vsel %vm168, %v144, 0
    %172 = vmatprep.subr.bf16.mxu0 0
    %173 = vmatpush1.bf16.msra.mxu0 %v164
    %174 = vmatprep.subr.bf16.mxu0 0
    %175 = vmatpush1.bf16.msra.mxu0 %v165
    %176 = vmatprep.subr.bf16.mxu0 0
    %177 = vmatpush1.bf16.msra.mxu0 0
    %178 = vmatprep.subr.bf16.mxu0 0
    %179 = vmatpush1.bf16.msra.mxu0 0
    %180 = vmatprep.subr.bf16.mxu0 0
    %181 = vmatpush1.bf16.msra.mxu0 0
    %182 = vmatprep.subr.bf16.mxu0 0
    %183 = vmatpush1.bf16.msra.mxu0 0
    %184 = vmatprep.subr.bf16.mxu0 0
    %185 = vmatpush1.bf16.msra.mxu0 0
    %186 = vmatprep.subr.bf16.mxu0 0
    %187 = vmatpush1.bf16.msra.mxu0 0
    %188 = vmatprep.subr.bf16.mxu0 0
    %189 = vmatpush1.bf16.msra.mxu0 0
    %190 = vmatprep.subr.bf16.mxu0 0
    %191 = vmatpush1.bf16.msra.mxu0 0
    %192 = vmatprep.subr.bf16.mxu0 0
    %193 = vmatpush1.bf16.msra.mxu0 0
    %194 = vmatprep.subr.bf16.mxu0 0
    %195 = vmatpush1.bf16.msra.mxu0 0
    %196 = vmatprep.subr.bf16.mxu0 0
    %197 = vmatpush1.bf16.msra.mxu0 0
    %198 = vmatprep.subr.bf16.mxu0 0
    %199 = vmatpush1.bf16.msra.mxu0 0
    %200 = vmatprep.subr.bf16.mxu0 0
    %201 = vmatpush1.bf16.msra.mxu0 0
    %202 = vmatprep.subr.bf16.mxu0 0
    %203 = vmatpush1.bf16.msra.mxu0 0
    %204 = vmatprep.mubr.bf16.mxu0 0
    %205 = vmatmul.mubr.bf16.gmra.mrb[0].mxu0 %v170
    %v206 = vpop.f32.mrb[0].mxu0
    %v207 = vadd.f32 %v154, %v206
    %v208 = vpop.f32.mrb[0].mxu0
    %v209 = vpop.f32.mrb[0].mxu0
    %v210 = vpop.f32.mrb[0].mxu0
    %211 = vdwg.mxu0
    %v212 = vmul.f32 %v207, 0.5
    %v213 = vtanh.pop %v212
    %v214 = vmul.f32 %v213, 0.5
    %v215 = vadd.f32 %v214, 0.5
    %v216 = vpack.c.bf16 %v215, %v215
    %v217 = vld [vmem:[%s5] sm:$0xf]
    %v218 = vld [vmem:[%s5 + $0x4] sm:$0xf]
    %v219 = vld [vmem:[%s5 + $0x8] sm:$0xf]
    %v220 = vld [vmem:[%s5 + $0xc] sm:$0xf]
    %v221 = vld [vmem:[%s6] sm:$0x1]
    %v223 = vlaneseq
    %v224 = vshrl.u32 %v223, 7
    %v225 = vsub.s32 0, %v224
    %v226 = vrot.slane %v221, %v225
    %v232 = vunpack.c.l.b16 %v217
    %v233 = vunpack.c.l.b16 %v218
    %v234 = vunpack.c.l.b16 %v219
    %v235 = vunpack.c.l.b16 %v220
    %v236 = vpack.c.b16 %v233, %v232
    %v237 = vpack.c.b16 %v235, %v234
    %v241 = vsel %vm168, %v216, 0
    %243 = vmatprep.subr.bf16.mxu0 0
    %244 = vmatpush1.bf16.msra.mxu0 %v236
    %245 = vmatprep.subr.bf16.mxu0 0
    %246 = vmatpush1.bf16.msra.mxu0 %v237
    %247 = vmatprep.subr.bf16.mxu0 0
    %248 = vmatpush1.bf16.msra.mxu0 0
    %249 = vmatprep.subr.bf16.mxu0 0
    %250 = vmatpush1.bf16.msra.mxu0 0
    %251 = vmatprep.subr.bf16.mxu0 0
    %252 = vmatpush1.bf16.msra.mxu0 0
    %253 = vmatprep.subr.bf16.mxu0 0
    %254 = vmatpush1.bf16.msra.mxu0 0
    %255 = vmatprep.subr.bf16.mxu0 0
    %256 = vmatpush1.bf16.msra.mxu0 0
    %257 = vmatprep.subr.bf16.mxu0 0
    %258 = vmatpush1.bf16.msra.mxu0 0
    %259 = vmatprep.subr.bf16.mxu0 0
    %260 = vmatpush1.bf16.msra.mxu0 0
    %261 = vmatprep.subr.bf16.mxu0 0
    %262 = vmatpush1.bf16.msra.mxu0 0
    %263 = vmatprep.subr.bf16.mxu0 0
    %264 = vmatpush1.bf16.msra.mxu0 0
    %265 = vmatprep.subr.bf16.mxu0 0
    %266 = vmatpush1.bf16.msra.mxu0 0
    %267 = vmatprep.subr.bf16.mxu0 0
    %268 = vmatpush1.bf16.msra.mxu0 0
    %269 = vmatprep.subr.bf16.mxu0 0
    %270 = vmatpush1.bf16.msra.mxu0 0
    %271 = vmatprep.subr.bf16.mxu0 0
    %272 = vmatpush1.bf16.msra.mxu0 0
    %273 = vmatprep.subr.bf16.mxu0 0
    %274 = vmatpush1.bf16.msra.mxu0 0
    %275 = vmatprep.mubr.bf16.mxu0 0
    %276 = vmatmul.mubr.bf16.gmra.mrb[0].mxu0 %v241
    %v277 = vpop.f32.mrb[0].mxu0
    %v278 = vadd.f32 %v226, %v277
    %v279 = vpop.f32.mrb[0].mxu0
    %v280 = vpop.f32.mrb[0].mxu0
    %v281 = vpop.f32.mrb[0].mxu0
    %282 = vdwg.mxu0
    %v283 = vmul.f32 %v278, 0.5
    %v284 = vtanh.pop %v283
    %v285 = vmul.f32 %v284, 0.5
    %v286 = vadd.f32 %v285, 0.5
    %v287 = vpack.c.bf16 %v286, %v286
    %v288 = vld [vmem:[#allocation7] sm:$0xf]
    %v289 = vld [vmem:[#allocation7 + $0x4] sm:$0xf]
    %v290 = vld [vmem:[#allocation7 + $0x8] sm:$0xf]
    %v291 = vld [vmem:[#allocation7 + $0xc] sm:$0xf]
    %v292 = vld [vmem:[%s8] sm:$0x1]
    %v294 = vlaneseq
    %v295 = vshrl.u32 %v294, 7
    %v296 = vsub.s32 0, %v295
    %v297 = vrot.slane %v292, %v296
    %v303 = vunpack.c.l.b16 %v288
    %v304 = vunpack.c.l.b16 %v289
    %v305 = vunpack.c.l.b16 %v290
    %v306 = vunpack.c.l.b16 %v291
    %v307 = vpack.c.b16 %v304, %v303
    %v308 = vpack.c.b16 %v306, %v305
    %v312 = vsel %vm168, %v287, 0
    %314 = vmatprep.subr.bf16.mxu0 0
    %315 = vmatpush1.bf16.msra.mxu0 %v307
    %316 = vmatprep.subr.bf16.mxu0 0
    %317 = vmatpush1.bf16.msra.mxu0 %v308
    %318 = vmatprep.subr.bf16.mxu0 0
    %319 = vmatpush1.bf16.msra.mxu0 0
    %320 = vmatprep.subr.bf16.mxu0 0
    %321 = vmatpush1.bf16.msra.mxu0 0
    %322 = vmatprep.subr.bf16.mxu0 0
    %323 = vmatpush1.bf16.msra.mxu0 0
    %324 = vmatprep.subr.bf16.mxu0 0
    %325 = vmatpush1.bf16.msra.mxu0 0
    %326 = vmatprep.subr.bf16.mxu0 0
    %327 = vmatpush1.bf16.msra.mxu0 0
    %328 = vmatprep.subr.bf16.mxu0 0
    %329 = vmatpush1.bf16.msra.mxu0 0
    %330 = vmatprep.subr.bf16.mxu0 0
    %331 = vmatpush1.bf16.msra.mxu0 0
    %332 = vmatprep.subr.bf16.mxu0 0
    %333 = vmatpush1.bf16.msra.mxu0 0
    %334 = vmatprep.subr.bf16.mxu0 0
    %335 = vmatpush1.bf16.msra.mxu0 0
    %336 = vmatprep.subr.bf16.mxu0 0
    %337 = vmatpush1.bf16.msra.mxu0 0
    %338 = vmatprep.subr.bf16.mxu0 0
    %339 = vmatpush1.bf16.msra.mxu0 0
    %340 = vmatprep.subr.bf16.mxu0 0
    %341 = vmatpush1.bf16.msra.mxu0 0
    %342 = vmatprep.subr.bf16.mxu0 0
    %343 = vmatpush1.bf16.msra.mxu0 0
    %344 = vmatprep.subr.bf16.mxu0 0
    %345 = vmatpush1.bf16.msra.mxu0 0
    %346 = vmatprep.mubr.bf16.mxu0 0
    %347 = vmatmul.mubr.bf16.gmra.mrb[0].mxu0 %v312
    %v348 = vpop.f32.mrb[0].mxu0
    %v349 = vadd.f32 %v297, %v348
    %v350 = vpop.f32.mrb[0].mxu0
    %v351 = vpop.f32.mrb[0].mxu0
    %v352 = vpop.f32.mrb[0].mxu0
    %353 = vdwg.mxu0
    %v354 = vmul.f32 %v349, 0.5
    %v355 = vtanh.pop %v354
    %v356 = vmul.f32 %v355, 0.5
    %v357 = vadd.f32 %v356, 0.5
    %v358 = vpack.c.bf16 %v357, %v357
    %v359 = vld [vmem:[%s9] sm:$0xf]
    %v360 = vld [vmem:[%s9 + $0x4] sm:$0xf]
    %v361 = vld [vmem:[%s9 + $0x8] sm:$0xf]
    %v362 = vld [vmem:[%s9 + $0xc] sm:$0xf]
    %v363 = vld [vmem:[%s10] sm:$0x1]
    %v365 = vlaneseq
    %v366 = vshrl.u32 %v365, 7
    %v367 = vsub.s32 0, %v366
    %v368 = vrot.slane %v363, %v367
    %v374 = vunpack.c.l.b16 %v359
    %v375 = vunpack.c.l.b16 %v360
    %v376 = vunpack.c.l.b16 %v361
    %v377 = vunpack.c.l.b16 %v362
    %v378 = vpack.c.b16 %v375, %v374
    %v379 = vpack.c.b16 %v377, %v376
    %v383 = vsel %vm168, %v358, 0
    %385 = vmatprep.subr.bf16.mxu0 0
    %386 = vmatpush1.bf16.msra.mxu0 %v378
    %387 = vmatprep.subr.bf16.mxu0 0
    %388 = vmatpush1.bf16.msra.mxu0 %v379
    %389 = vmatprep.subr.bf16.mxu0 0
    %390 = vmatpush1.bf16.msra.mxu0 0
    %391 = vmatprep.subr.bf16.mxu0 0
    %392 = vmatpush1.bf16.msra.mxu0 0
    %393 = vmatprep.subr.bf16.mxu0 0
    %394 = vmatpush1.bf16.msra.mxu0 0
    %395 = vmatprep.subr.bf16.mxu0 0
    %396 = vmatpush1.bf16.msra.mxu0 0
    %397 = vmatprep.subr.bf16.mxu0 0
    %398 = vmatpush1.bf16.msra.mxu0 0
    %399 = vmatprep.subr.bf16.mxu0 0
    %400 = vmatpush1.bf16.msra.mxu0 0
    %401 = vmatprep.subr.bf16.mxu0 0
    %402 = vmatpush1.bf16.msra.mxu0 0
    %403 = vmatprep.subr.bf16.mxu0 0
    %404 = vmatpush1.bf16.msra.mxu0 0
    %405 = vmatprep.subr.bf16.mxu0 0
    %406 = vmatpush1.bf16.msra.mxu0 0
    %407 = vmatprep.subr.bf16.mxu0 0
    %408 = vmatpush1.bf16.msra.mxu0 0
    %409 = vmatprep.subr.bf16.mxu0 0
    %410 = vmatpush1.bf16.msra.mxu0 0
    %411 = vmatprep.subr.bf16.mxu0 0
    %412 = vmatpush1.bf16.msra.mxu0 0
    %413 = vmatprep.subr.bf16.mxu0 0
    %414 = vmatpush1.bf16.msra.mxu0 0
    %415 = vmatprep.subr.bf16.mxu0 0
    %416 = vmatpush1.bf16.msra.mxu0 0
    %417 = vmatprep.mubr.bf16.mxu0 0
    %418 = vmatmul.mubr.bf16.gmra.mrb[0].mxu0 %v383
    %v419 = vpop.f32.mrb[0].mxu0
    %v420 = vadd.f32 %v368, %v419
    %v421 = vpop.f32.mrb[0].mxu0
    %v422 = vpop.f32.mrb[0].mxu0
    %v423 = vpop.f32.mrb[0].mxu0
    %424 = vdwg.mxu0
    %vm425 = vcmask 64512
    %v426 = vsel %vm425, %v420, -inf
    %427 = vmax.xlane.f32.xlu0 %v426
    %v428 = vpop.xlane.xlu0 %427
    %v429 = vsub.f32 %v420, %v428
    %v430 = vmul.f32 %v429, 1.442695
    %v431 = vpow.pop %v430
    %v432 = vsel %vm425, %v431, 0.0
    %433 = vadd.xlane.f32.xlu0 %v432
    %v434 = vpop.xlane.xlu0 %433
    %v435 = vrcp.pop %v434
    %v436 = vmul.f32 1.0, %v435
    %v437 = vmul.f32 %v431, %v436
    %438 = vst.msk [vmem:[#allocation8] sm:$0xff] %vm425, %v437
    // Predicated region
    $region58: #{tpu_custom_call.1} parent=1 // pred_check
      _
    $region59: #{tpu_custom_call.1} parent=1 // pred_check_branch
      %440 = sbr.rel (0) target = $region61
    $region60: #{tpu_custom_call.1} parent=1 // pred_region
      %s442 = ssub.s32 128, 128
      %443 = vsyncadd [#allocation4], %s442
      %s445 = sshll.u32 [#allocation8], 4
      %s446 = int_to_ptr.vmem [resolvable:$true] %s445
      %448 = dma.vmem_to_hbm [thread:$0]  %s446, 128, %s11, [#allocation4]
    $region61: #{tpu_custom_call.1} parent=1 // pred_fallthru
      _
    // Predicated region
    $region62: #{tpu_custom_call.1} parent=1 // pred_check
      _
    $region63: #{tpu_custom_call.1} parent=1 // pred_check_branch
      %450 = sbr.rel (0) target = $region65
    $region64: #{tpu_custom_call.1} parent=1 // pred_region
      %451 = dma.done [#allocation4], 128
    $region65: #{tpu_custom_call.1} parent=1 // pred_fallthru
      _
    %452 = vsyncpa [#allocation3], 1
    %453 = vsyncpa [#allocation6], 1
    %454 = vsyncpa [#allocation4], 1

</llo_original>
